<compile_context>
chip_gen: v5e
topology: v5e:2x2
jax: 0.10.0
libtpu: 0.0.40
codegen_flags: <defaults>
</compile_context>

<pallas_src>
import functools

import jax
import jax.numpy as jnp
from jax.experimental import pallas as pl
from jax.experimental.pallas import tpu as pltpu


LANE_PAD = 128  # every feature dimension is zero-padded to one full lane width


# ----------------------------------------------------------------------------
# Fused Pallas kernel: conv stack + fc stack + latent linear + gumbel-softmax
# ----------------------------------------------------------------------------
def _fused_catvae_kernel(*refs, n_pos, batch, c1, latent_dim, inv_temp,
                         has_conv2):
    """refs = (lhs1, u, conv1 (w,b), [conv2 (w,b)], dense (w,b)..., reparam, latent).

    lhs1 : (n_pos*batch, 128) bf16  wrapper-built im2col of conv1 (K-compacted);
                                    row index = out_position*batch + b.
    u    : (batch, 128) f32         uniform noise for the Gumbel sample.
    conv1 w : (128, 128) bf16       rows [0, k*k*cin) hold the real weights.
    conv2 w : (n_chunks*128, 128) bf16
                                    row 128*(t//tpc) + c1*(t%tpc) + c holds
                                    w[t, c, :] with tpc = 128 // c1.
    dense w : (128, 128) bf16, biases (1, 128) f32; last pair = latent layer.
    """
    lhs1_ref, u_ref = refs[0], refs[1]
    reparam_ref, latent_ref = refs[-2], refs[-1]
    params = refs[2:-2]
    w1_ref, b1_ref = params[0], params[1]
    if has_conv2:
        w2_ref, b2_ref = params[2], params[3]
        dense = params[4:]
    else:
        dense = params[2:]
    npad = u_ref.shape[1]

    # ---- conv1: ONE im2col matmul over every output position & batch row ----
    z1 = jnp.dot(lhs1_ref[...], w1_ref[...], preferred_element_type=jnp.float32)
    a1 = jnp.maximum(z1 + b1_ref[...], 0.0)                # (n_pos*batch, 128)

    if has_conv2:
        # ---- lane-pack the k*k conv1-output taps into a compact conv2 LHS ---
        # Tap t lives in rows [t*batch, (t+1)*batch); its real channels sit in
        # lanes 0..c1-1 and every other lane is exactly 0 (zero weight columns
        # + zero bias + ReLU(0)=0), so an XLU lane-roll by (t % tpc)*c1 plus a
        # sum builds the compacted im2col row with no masking or lane shuffles.
        tpc = npad // c1                        # taps per 128-lane chunk
        n_chunks = pl.cdiv(n_pos, tpc)
        chunks = []
        for ch in range(n_chunks):
            acc = None
            for j in range(tpc):
                t = ch * tpc + j
                if t >= n_pos:
                    break
                tap = a1[t * batch:(t + 1) * batch, :]      # (batch, 128), vreg-aligned
                if j > 0:
                    tap = pltpu.roll(tap, shift=j * c1, axis=1)
                acc = tap if acc is None else acc + tap
            chunks.append(acc)
        lhs2 = chunks[0] if n_chunks == 1 else jnp.concatenate(chunks, axis=-1)
        z2 = jnp.dot(lhs2.astype(jnp.bfloat16), w2_ref[...],
                     preferred_element_type=jnp.float32)    # ONE matmul, K folded
        h = jnp.maximum(z2 + b2_ref[...], 0.0)              # (batch, 128)
    else:
        h = a1                                              # n_pos == 1 case

    # The conv stack collapses spatial dims to 1x1 (checked at build time),
    # so Flatten == the single remaining (batch, C_last) activation tile.

    # ---- dense stack: [Linear + ReLU] * n_fc, then the latent Linear --------
    n_dense = len(dense) // 2
    for i in range(n_dense):
        w_ref, b_ref = dense[2 * i], dense[2 * i + 1]
        z = jnp.dot(h.astype(jnp.bfloat16), w_ref[...],
                    preferred_element_type=jnp.float32) + b_ref[...]
        h = jnp.maximum(z, 0.0) if i < n_dense - 1 else z
    latent = h                                              # (batch, 128) f32
    latent_ref[...] = latent

    # ---- reparameterize_gumbel_softmax over the valid latent lanes (f32) ----
    eps = 1e-20
    g = -jnp.log(-jnp.log(u_ref[...] + eps) + eps)          # Gumbel(0, 1)
    y = (latent + g) * inv_temp                             # == (latent + g)/T
    lane = jax.lax.broadcasted_iota(jnp.int32, y.shape, 1)
    valid = lane < latent_dim
    m = jnp.max(jnp.where(valid, y, -jnp.inf), axis=-1, keepdims=True)
    e = jnp.where(valid, jnp.exp(y - m), 0.0)
    denom = jnp.sum(e, axis=-1, keepdims=True)
    # exact reciprocal (approx=False) so softmax rows sum to 1 within 1e-5
    reparam_ref[...] = e * pl.reciprocal(denom)


# ----------------------------------------------------------------------------
# Wrapper (layout plumbing + single pallas_call)
# ----------------------------------------------------------------------------
def catvae_pallas_forward(padded, x_nchw, u, *, spatial, ksize, conv_layers,
                          latent_dim, inv_temp):
    """Fused CatVAE forward. Returns (reparam, latent), each (B, latent_dim)."""
    batch, cin = x_nchw.shape[0], x_nchw.shape[1]
    npad = LANE_PAD
    bpad = ((batch + 7) // 8) * 8      # sublane-align batch so tap slices are vregs
    n_conv = len(conv_layers)

    # Static spatial bookkeeping (all Python ints).
    s = spatial
    for _ in range(n_conv):
        s = s - ksize + 1
    assert s == 1, "campa CatVAE encoder requires the conv stack to reach 1x1"
    # TODO(synk): conv stacks deeper than 2 valid convs would need per-layer
    #             in-kernel im2col packing; campa configs use at most 2.
    assert n_conv in (1, 2)
    h1 = spatial - ksize + 1           # conv1 output spatial extent
    n_pos = h1 * h1

    # ---- host-side im2col for conv1 (layout plumbing, not compute) ----------
    x = x_nchw.astype(jnp.float32)
    if bpad != batch:
        x = jnp.pad(x, ((0, bpad - batch), (0, 0), (0, 0), (0, 0)))
    x_nhwc = jnp.transpose(x, (0, 2, 3, 1))                    # (bpad,H,W,cin)
    cols = [x_nhwc[:, ki:ki + h1, kj:kj + h1, :]
            for ki in range(ksize) for kj in range(ksize)]
    patches = jnp.concatenate(cols, axis=-1)                   # (bpad,h1,h1,k*k*cin)
    patches = jnp.transpose(patches, (1, 2, 0, 3))             # position-major rows
    patches = patches.reshape(n_pos * bpad, ksize * ksize * cin)
    lhs1 = jnp.pad(patches, ((0, 0), (0, npad - ksize * ksize * cin)))
    lhs1 = lhs1.astype(jnp.bfloat16)                           # bf16 MXU operand

    # Uniform noise lane-padded; padded lanes/rows are masked/sliced away.
    u_p = jnp.pad(u.astype(jnp.float32),
                  ((0, bpad - u.shape[0]), (0, npad - u.shape[1])),
                  constant_values=0.5)

    inputs = [lhs1, u_p]
    inputs += list(padded["conv1"])
    if n_conv == 2:
        inputs += list(padded["conv2"])
    for w, b in padded["dense"]:
        inputs += [w, b]

    # Advisory cost estimate so XLA schedules the tiny custom call correctly.
    flops = 2 * lhs1.shape[0] * npad * npad
    if n_conv == 2:
        flops += 2 * bpad * padded["conv2"][0].shape[0] * npad
    flops += 2 * len(padded["dense"]) * bpad * npad * npad
    in_bytes = sum(int(a.size) * a.dtype.itemsize for a in inputs)
    out_bytes = 2 * bpad * npad * 4
    cost = pl.CostEstimate(flops=int(flops),
                           transcendentals=int(3 * bpad * npad),
                           bytes_accessed=int(in_bytes + out_bytes))

    kernel = functools.partial(
        _fused_catvae_kernel, n_pos=n_pos, batch=bpad, c1=conv_layers[0],
        latent_dim=latent_dim, inv_temp=inv_temp, has_conv2=(n_conv == 2))
    vmem = pl.BlockSpec(memory_space=pltpu.MemorySpace.VMEM)
    reparam_p, latent_p = pl.pallas_call(
        kernel,
        out_shape=(jax.ShapeDtypeStruct((bpad, npad), jnp.float32),
                   jax.ShapeDtypeStruct((bpad, npad), jnp.float32)),
        in_specs=[vmem] * len(inputs),
        out_specs=(vmem, vmem),
        cost_estimate=cost,
    )(*inputs)
    # Slice the batch / lane padding back off (valid rows & columns only).
    return reparam_p[:batch, :latent_dim], latent_p[:batch, :latent_dim]


# ----------------------------------------------------------------------------
# Parameter construction (raw torch-style shapes + compacted/padded copies)
# ----------------------------------------------------------------------------
def init_params(key, num_channels, conv_layers, kernel_size, fc_layers, latent_dim):
    """Synthetic uniform(-1/sqrt(fan_in), +1/sqrt(fan_in)) init, unpadded shapes."""
    raw = {"convs": [], "fcs": [], "latent": None}
    in_c = num_channels
    for out_c in conv_layers:
        key, kw_, kb_ = jax.random.split(key, 3)
        fan_in = in_c * kernel_size * kernel_size
        s = 1.0 / float(fan_in) ** 0.5
        w = jax.random.uniform(kw_, (kernel_size * kernel_size, in_c, out_c),
                               jnp.float32, -s, s)            # (tap, cin, cout)
        b = jax.random.uniform(kb_, (out_c,), jnp.float32, -s, s)
        raw["convs"].append((w, b))
        in_c = out_c
    in_f = in_c   # conv stack ends at 1x1 spatial -> flatten size == channels
    for out_f in fc_layers:
        key, kw_, kb_ = jax.random.split(key, 3)
        s = 1.0 / float(in_f) ** 0.5
        raw["fcs"].append(
            (jax.random.uniform(kw_, (in_f, out_f), jnp.float32, -s, s),
             jax.random.uniform(kb_, (out_f,), jnp.float32, -s, s)))
        in_f = out_f
    key, kw_, kb_ = jax.random.split(key, 3)
    s = 1.0 / float(in_f) ** 0.5
    raw["latent"] = (
        jax.random.uniform(kw_, (in_f, latent_dim), jnp.float32, -s, s),
        jax.random.uniform(kb_, (latent_dim,), jnp.float32, -s, s))
    return raw


def pad_params(raw):
    """Compact + 128-lane-pad every parameter for the fused kernel.

    Matmul weights are stored as bf16 (native MXU operands, f32 accumulation in
    the kernel); biases stay f32. Padded weight rows/columns and bias entries
    are zero, so padded activation lanes stay exactly 0 through every
    Linear+ReLU (ReLU(0)=0) — which the in-kernel roll-packing of conv1 outputs
    relies on — and the latent padding is masked out of the softmax.
    """
    npad = LANE_PAD
    padded = {"dense": []}
    convs = raw["convs"]

    # conv1: K-compacted to its real k*k*cin rows (wrapper builds a matching
    # im2col LHS), instead of 9 separate 128x128 zero-padded tap weights.
    w1, b1 = convs[0]
    kk, cin, c1 = w1.shape
    w1c = (jnp.zeros((npad, npad), jnp.float32)
           .at[:kk * cin, :c1].set(w1.reshape(kk * cin, c1)))
    b1p = jnp.zeros((1, npad), jnp.float32).at[0, :c1].set(b1)
    padded["conv1"] = (w1c.astype(jnp.bfloat16), b1p)

    if len(convs) > 1:
        # conv2: K-compacted to the lane-packed tap layout the kernel builds:
        # row 128*(t // tpc) + c1*(t % tpc) + c  <-  w2[t, c, :], tpc = 128//c1.
        w2, b2 = convs[1]
        kk2, c1_in, c2 = w2.shape
        assert c1_in == c1
        tpc = npad // c1_in
        n_chunks = -(-kk2 // tpc)
        w2c = jnp.zeros((n_chunks * npad, npad), jnp.float32)
        for t in range(kk2):
            row0 = npad * (t // tpc) + c1_in * (t % tpc)
            w2c = w2c.at[row0:row0 + c1_in, :c2].set(w2[t])
        b2p = jnp.zeros((1, npad), jnp.float32).at[0, :c2].set(b2)
        padded["conv2"] = (w2c.astype(jnp.bfloat16), b2p)

    for w, b in list(raw["fcs"]) + [raw["latent"]]:
        din, dout = w.shape
        wp = jnp.zeros((npad, npad), jnp.float32).at[:din, :dout].set(w)
        bp = jnp.zeros((1, npad), jnp.float32).at[0, :dout].set(b)
        padded["dense"].append((wp.astype(jnp.bfloat16), bp))
    return padded


def reference_forward(raw, x_nchw, u, ksize, temperature):
    """Pure-JAX f32 reference of CatVAEModelTorch.forward (same parameters)."""
    x = jnp.transpose(x_nchw, (0, 2, 3, 1)).astype(jnp.float32)   # NHWC
    for w, b in raw["convs"]:
        _, h, wd, c = x.shape
        ho, wo = h - ksize + 1, wd - ksize + 1
        cols = [x[:, ki:ki + ho, kj:kj + wo, :]
                for ki in range(ksize) for kj in range(ksize)]
        patches = jnp.concatenate(cols, axis=-1)                  # (B,ho,wo,k*k*c)
        x = jax.nn.relu(patches @ w.reshape(ksize * ksize * c, -1) + b)
    h = x.reshape(x.shape[0], -1)   # spatial is 1x1 -> matches torch Flatten
    for w, b in raw["fcs"]:
        h = jax.nn.relu(h @ w + b)
    wl, bl = raw["latent"]
    latent = h @ wl + bl
    g = -jnp.log(-jnp.log(u + 1e-20) + 1e-20)
    reparam = jax.nn.softmax((latent + g) / temperature, axis=-1)
    return reparam, latent


# ----------------------------------------------------------------------------
if __name__ == "__main__":
    # campa-style config: 5x5 patches, two 3x3 valid convs -> 1x1 spatial.
    BATCH = 8
    NUM_CHANNELS = 4
    SPATIAL = 5
    CONV_LAYERS = [16, 32]
    KERNEL_SIZE = 3
    FC_LAYERS = [32, 16]
    LATENT_DIM = 8
    INITIAL_TEMPERATURE = 10.0   # CatVAE passes self.temperature (=initial) to softmax

    root = jax.random.PRNGKey(0)
    k_params, k_x, k_u = jax.random.split(root, 3)

    raw_params = init_params(k_params, NUM_CHANNELS, CONV_LAYERS, KERNEL_SIZE,
                             FC_LAYERS, LATENT_DIM)
    padded_params = pad_params(raw_params)

    # PyTorch-layout input (NCHW).
    x = jax.random.normal(k_x, (BATCH, NUM_CHANNELS, SPATIAL, SPATIAL), jnp.float32)
    # TODO(synk): torch.rand uses torch's global RNG; replaced by an explicit
    #             deterministic uniform draw fed to the kernel.
    u = jax.random.uniform(k_u, (BATCH, LATENT_DIM), jnp.float32)

    fwd = jax.jit(functools.partial(
        catvae_pallas_forward,
        spatial=SPATIAL, ksize=KERNEL_SIZE, conv_layers=tuple(CONV_LAYERS),
        latent_dim=LATENT_DIM, inv_temp=1.0 / INITIAL_TEMPERATURE))

    reparam, latent = fwd(padded_params, x, u)
    reparam = jax.block_until_ready(reparam)
    latent = jax.block_until_ready(latent)

    # Correctness checks against a pure-JAX f32 reference of the torch forward.
    ref_reparam, ref_latent = reference_forward(raw_params, x, u,
                                                KERNEL_SIZE, INITIAL_TEMPERATURE)
    assert reparam.shape == (BATCH, LATENT_DIM)
    assert latent.shape == (BATCH, LATENT_DIM)
    assert bool(jnp.all(jnp.isfinite(reparam))) and bool(jnp.all(jnp.isfinite(latent)))
    # Softmax math is f32 with an exact reciprocal -> rows still sum to 1.
    assert bool(jnp.allclose(jnp.sum(reparam, axis=-1), 1.0, atol=1e-5))
    # bf16 MXU operands (f32 accumulation): compare against the f32 reference
    # with a correspondingly relaxed tolerance (review correctness note).
    assert bool(jnp.allclose(latent, ref_latent, atol=3e-2, rtol=3e-2))
    assert bool(jnp.allclose(reparam, ref_reparam, atol=5e-3, rtol=5e-3))

    print("KERNEL_OK")
</pallas_src>

<mosaic_0001>
module attributes {stable_mosaic.version = 11 : i64} {
  func.func @_fused_catvae_kernel(%arg0: memref<72x128xbf16, #tpu.memory_space<vmem>>, %arg1: memref<8x128xf32, #tpu.memory_space<vmem>>, %arg2: memref<128x128xbf16, #tpu.memory_space<vmem>>, %arg3: memref<1x128xf32, #tpu.memory_space<vmem>>, %arg4: memref<256x128xbf16, #tpu.memory_space<vmem>>, %arg5: memref<1x128xf32, #tpu.memory_space<vmem>>, %arg6: memref<128x128xbf16, #tpu.memory_space<vmem>>, %arg7: memref<1x128xf32, #tpu.memory_space<vmem>>, %arg8: memref<128x128xbf16, #tpu.memory_space<vmem>>, %arg9: memref<1x128xf32, #tpu.memory_space<vmem>>, %arg10: memref<128x128xbf16, #tpu.memory_space<vmem>>, %arg11: memref<1x128xf32, #tpu.memory_space<vmem>>, %arg12: memref<8x128xf32, #tpu.memory_space<vmem>>, %arg13: memref<8x128xf32, #tpu.memory_space<vmem>>) attributes {dimension_semantics = [], scalar_prefetch = 0 : i64, scratch_operands = 0 : i64, tpu.core_type = #tpu.core_type<tc>} {
    %c0 = arith.constant 0 : index
    %c0_0 = arith.constant 0 : index
    %0 = vector.load %arg0[%c0, %c0_0] : memref<72x128xbf16, #tpu.memory_space<vmem>>, vector<72x128xbf16>
    %c0_1 = arith.constant 0 : index
    %c0_2 = arith.constant 0 : index
    %1 = vector.load %arg2[%c0_1, %c0_2] : memref<128x128xbf16, #tpu.memory_space<vmem>>, vector<128x128xbf16>
    %cst = arith.constant dense<0.000000e+00> : vector<72x128xf32>
    %2 = tpu.matmul %0, %1, %cst {dimension_numbers = #tpu.dot_dimension_numbers<[1], [0], [0], [1], [0, 0, 1, 1], [], []>} : vector<72x128xbf16>, vector<128x128xbf16>, vector<72x128xf32> -> vector<72x128xf32>
    %c0_3 = arith.constant 0 : index
    %c0_4 = arith.constant 0 : index
    %3 = vector.load %arg3[%c0_3, %c0_4] : memref<1x128xf32, #tpu.memory_space<vmem>>, vector<1x128xf32>
    %4 = vector.broadcast %3 : vector<1x128xf32> to vector<72x128xf32>
    %5 = arith.addf %2, %4 : vector<72x128xf32>
    %cst_5 = arith.constant 0.000000e+00 : f32
    %6 = vector.broadcast %cst_5 : f32 to vector<72x128xf32>
    %7 = arith.maximumf %5, %6 : vector<72x128xf32>
    %8 = vector.extract_strided_slice %7 {offsets = [0, 0], sizes = [8, 128], strides = [1, 1]} : vector<72x128xf32> to vector<8x128xf32>
    %9 = vector.extract_strided_slice %7 {offsets = [8, 0], sizes = [8, 128], strides = [1, 1]} : vector<72x128xf32> to vector<8x128xf32>
    %c16_i32 = arith.constant 16 : i32
    %10 = tpu.dynamic_rotate %9 by %c16_i32 dim 1 : vector<8x128xf32>, i32 -> vector<8x128xf32>
    %11 = arith.addf %8, %10 : vector<8x128xf32>
    %12 = vector.extract_strided_slice %7 {offsets = [16, 0], sizes = [8, 128], strides = [1, 1]} : vector<72x128xf32> to vector<8x128xf32>
    %c32_i32 = arith.constant 32 : i32
    %13 = tpu.dynamic_rotate %12 by %c32_i32 dim 1 : vector<8x128xf32>, i32 -> vector<8x128xf32>
    %14 = arith.addf %11, %13 : vector<8x128xf32>
    %15 = vector.extract_strided_slice %7 {offsets = [24, 0], sizes = [8, 128], strides = [1, 1]} : vector<72x128xf32> to vector<8x128xf32>
    %c48_i32 = arith.constant 48 : i32
    %16 = tpu.dynamic_rotate %15 by %c48_i32 dim 1 : vector<8x128xf32>, i32 -> vector<8x128xf32>
    %17 = arith.addf %14, %16 : vector<8x128xf32>
    %18 = vector.extract_strided_slice %7 {offsets = [32, 0], sizes = [8, 128], strides = [1, 1]} : vector<72x128xf32> to vector<8x128xf32>
    %c64_i32 = arith.constant 64 : i32
    %19 = tpu.dynamic_rotate %18 by %c64_i32 dim 1 : vector<8x128xf32>, i32 -> vector<8x128xf32>
    %20 = arith.addf %17, %19 : vector<8x128xf32>
    %21 = vector.extract_strided_slice %7 {offsets = [40, 0], sizes = [8, 128], strides = [1, 1]} : vector<72x128xf32> to vector<8x128xf32>
    %c80_i32 = arith.constant 80 : i32
    %22 = tpu.dynamic_rotate %21 by %c80_i32 dim 1 : vector<8x128xf32>, i32 -> vector<8x128xf32>
    %23 = arith.addf %20, %22 : vector<8x128xf32>
    %24 = vector.extract_strided_slice %7 {offsets = [48, 0], sizes = [8, 128], strides = [1, 1]} : vector<72x128xf32> to vector<8x128xf32>
    %c96_i32 = arith.constant 96 : i32
    %25 = tpu.dynamic_rotate %24 by %c96_i32 dim 1 : vector<8x128xf32>, i32 -> vector<8x128xf32>
    %26 = arith.addf %23, %25 : vector<8x128xf32>
    %27 = vector.extract_strided_slice %7 {offsets = [56, 0], sizes = [8, 128], strides = [1, 1]} : vector<72x128xf32> to vector<8x128xf32>
    %c112_i32 = arith.constant 112 : i32
    %28 = tpu.dynamic_rotate %27 by %c112_i32 dim 1 : vector<8x128xf32>, i32 -> vector<8x128xf32>
    %29 = arith.addf %26, %28 : vector<8x128xf32>
    %30 = vector.extract_strided_slice %7 {offsets = [64, 0], sizes = [8, 128], strides = [1, 1]} : vector<72x128xf32> to vector<8x128xf32>
    %31 = tpu.concatenate %29, %30 in 1 : vector<8x128xf32>, vector<8x128xf32> -> vector<8x256xf32>
    %32 = arith.truncf %31 : vector<8x256xf32> to vector<8x256xbf16>
    %c0_6 = arith.constant 0 : index
    %c0_7 = arith.constant 0 : index
    %33 = vector.load %arg4[%c0_6, %c0_7] : memref<256x128xbf16, #tpu.memory_space<vmem>>, vector<256x128xbf16>
    %cst_8 = arith.constant dense<0.000000e+00> : vector<8x128xf32>
    %34 = tpu.matmul %32, %33, %cst_8 {dimension_numbers = #tpu.dot_dimension_numbers<[1], [0], [0], [1], [0, 0, 1, 1], [], []>} : vector<8x256xbf16>, vector<256x128xbf16>, vector<8x128xf32> -> vector<8x128xf32>
    %c0_9 = arith.constant 0 : index
    %c0_10 = arith.constant 0 : index
    %35 = vector.load %arg5[%c0_9, %c0_10] : memref<1x128xf32, #tpu.memory_space<vmem>>, vector<1x128xf32>
    %36 = vector.broadcast %35 : vector<1x128xf32> to vector<8x128xf32>
    %37 = arith.addf %34, %36 : vector<8x128xf32>
    %cst_11 = arith.constant 0.000000e+00 : f32
    %38 = vector.broadcast %cst_11 : f32 to vector<8x128xf32>
    %39 = arith.maximumf %37, %38 : vector<8x128xf32>
    %40 = arith.truncf %39 : vector<8x128xf32> to vector<8x128xbf16>
    %c0_12 = arith.constant 0 : index
    %c0_13 = arith.constant 0 : index
    %41 = vector.load %arg6[%c0_12, %c0_13] : memref<128x128xbf16, #tpu.memory_space<vmem>>, vector<128x128xbf16>
    %cst_14 = arith.constant dense<0.000000e+00> : vector<8x128xf32>
    %42 = tpu.matmul %40, %41, %cst_14 {dimension_numbers = #tpu.dot_dimension_numbers<[1], [0], [0], [1], [0, 0, 1, 1], [], []>} : vector<8x128xbf16>, vector<128x128xbf16>, vector<8x128xf32> -> vector<8x128xf32>
    %c0_15 = arith.constant 0 : index
    %c0_16 = arith.constant 0 : index
    %43 = vector.load %arg7[%c0_15, %c0_16] : memref<1x128xf32, #tpu.memory_space<vmem>>, vector<1x128xf32>
    %44 = vector.broadcast %43 : vector<1x128xf32> to vector<8x128xf32>
    %45 = arith.addf %42, %44 : vector<8x128xf32>
    %cst_17 = arith.constant 0.000000e+00 : f32
    %46 = vector.broadcast %cst_17 : f32 to vector<8x128xf32>
    %47 = arith.maximumf %45, %46 : vector<8x128xf32>
    %48 = arith.truncf %47 : vector<8x128xf32> to vector<8x128xbf16>
    %c0_18 = arith.constant 0 : index
    %c0_19 = arith.constant 0 : index
    %49 = vector.load %arg8[%c0_18, %c0_19] : memref<128x128xbf16, #tpu.memory_space<vmem>>, vector<128x128xbf16>
    %cst_20 = arith.constant dense<0.000000e+00> : vector<8x128xf32>
    %50 = tpu.matmul %48, %49, %cst_20 {dimension_numbers = #tpu.dot_dimension_numbers<[1], [0], [0], [1], [0, 0, 1, 1], [], []>} : vector<8x128xbf16>, vector<128x128xbf16>, vector<8x128xf32> -> vector<8x128xf32>
    %c0_21 = arith.constant 0 : index
    %c0_22 = arith.constant 0 : index
    %51 = vector.load %arg9[%c0_21, %c0_22] : memref<1x128xf32, #tpu.memory_space<vmem>>, vector<1x128xf32>
    %52 = vector.broadcast %51 : vector<1x128xf32> to vector<8x128xf32>
    %53 = arith.addf %50, %52 : vector<8x128xf32>
    %cst_23 = arith.constant 0.000000e+00 : f32
    %54 = vector.broadcast %cst_23 : f32 to vector<8x128xf32>
    %55 = arith.maximumf %53, %54 : vector<8x128xf32>
    %56 = arith.truncf %55 : vector<8x128xf32> to vector<8x128xbf16>
    %c0_24 = arith.constant 0 : index
    %c0_25 = arith.constant 0 : index
    %57 = vector.load %arg10[%c0_24, %c0_25] : memref<128x128xbf16, #tpu.memory_space<vmem>>, vector<128x128xbf16>
    %cst_26 = arith.constant dense<0.000000e+00> : vector<8x128xf32>
    %58 = tpu.matmul %56, %57, %cst_26 {dimension_numbers = #tpu.dot_dimension_numbers<[1], [0], [0], [1], [0, 0, 1, 1], [], []>} : vector<8x128xbf16>, vector<128x128xbf16>, vector<8x128xf32> -> vector<8x128xf32>
    %c0_27 = arith.constant 0 : index
    %c0_28 = arith.constant 0 : index
    %59 = vector.load %arg11[%c0_27, %c0_28] : memref<1x128xf32, #tpu.memory_space<vmem>>, vector<1x128xf32>
    %60 = vector.broadcast %59 : vector<1x128xf32> to vector<8x128xf32>
    %61 = arith.addf %58, %60 : vector<8x128xf32>
    %c0_29 = arith.constant 0 : index
    %c0_30 = arith.constant 0 : index
    %62 = vector.load %arg13[%c0_29, %c0_30] : memref<8x128xf32, #tpu.memory_space<vmem>>, vector<8x128xf32>
    tpu.vector_store %arg13[%c0_29, %c0_30], %61 {strides = array<i32>} : memref<8x128xf32, #tpu.memory_space<vmem>>, vector<8x128xf32>,
    %c0_31 = arith.constant 0 : index
    %c0_32 = arith.constant 0 : index
    %63 = vector.load %arg1[%c0_31, %c0_32] : memref<8x128xf32, #tpu.memory_space<vmem>>, vector<8x128xf32>
    %cst_33 = arith.constant 9.99999968E-21 : f32
    %64 = vector.broadcast %cst_33 : f32 to vector<8x128xf32>
    %65 = arith.addf %63, %64 : vector<8x128xf32>
    %66 = math.log %65 : vector<8x128xf32>
    %cst_34 = arith.constant 0.000000e+00 : f32
    %67 = vector.broadcast %cst_34 : f32 to vector<8x128xf32>
    %68 = arith.subf %67, %66 : vector<8x128xf32>
    %cst_35 = arith.constant 9.99999968E-21 : f32
    %69 = vector.broadcast %cst_35 : f32 to vector<8x128xf32>
    %70 = arith.addf %68, %69 : vector<8x128xf32>
    %71 = math.log %70 : vector<8x128xf32>
    %cst_36 = arith.constant 0.000000e+00 : f32
    %72 = vector.broadcast %cst_36 : f32 to vector<8x128xf32>
    %73 = arith.subf %72, %71 : vector<8x128xf32>
    %74 = arith.addf %61, %73 : vector<8x128xf32>
    %cst_37 = arith.constant 1.000000e-01 : f32
    %75 = vector.broadcast %cst_37 : f32 to vector<8x128xf32>
    %76 = arith.mulf %74, %75 : vector<8x128xf32>
    %77 = tpu.iota {dimensions = array<i32: 1>} : vector<8x128xi32>
    %c8_i32 = arith.constant 8 : i32
    %78 = vector.broadcast %c8_i32 : i32 to vector<8x128xi32>
    %79 = arith.cmpi slt, %77, %78 : vector<8x128xi32>
    %cst_38 = arith.constant 0xFF800000 : f32
    %80 = vector.broadcast %cst_38 : f32 to vector<8x128xf32>
    %81 = arith.select %79, %76, %80 : vector<8x128xi1>, vector<8x128xf32>
    %cst_39 = arith.constant dense<0xFF800000> : vector<8xf32>
    %82 = vector.multi_reduction <maximumf>, %81, %cst_39 [1] : vector<8x128xf32> to vector<8xf32>
    %83 = vector.shape_cast %82 : vector<8xf32> to vector<8x1xf32>
    %84 = vector.broadcast %83 : vector<8x1xf32> to vector<8x128xf32>
    %85 = arith.subf %76, %84 : vector<8x128xf32>
    %86 = math.exp %85 : vector<8x128xf32>
    %cst_40 = arith.constant 0.000000e+00 : f32
    %87 = vector.broadcast %cst_40 : f32 to vector<8x128xf32>
    %88 = arith.select %79, %86, %87 : vector<8x128xi1>, vector<8x128xf32>
    %cst_41 = arith.constant dense<0.000000e+00> : vector<8xf32>
    %89 = vector.multi_reduction <add>, %88, %cst_41 [1] : vector<8x128xf32> to vector<8xf32>
    %90 = vector.shape_cast %89 : vector<8xf32> to vector<8x1xf32>
    %91 = tpu.reciprocal %90 : vector<8x1xf32> -> vector<8x1xf32>
    %92 = vector.broadcast %91 : vector<8x1xf32> to vector<8x128xf32>
    %93 = arith.mulf %88, %92 : vector<8x128xf32>
    %c0_42 = arith.constant 0 : index
    %c0_43 = arith.constant 0 : index
    %94 = vector.load %arg12[%c0_42, %c0_43] : memref<8x128xf32, #tpu.memory_space<vmem>>, vector<8x128xf32>
    tpu.vector_store %arg12[%c0_42, %c0_43], %93 {strides = array<i32>} : memref<8x128xf32, #tpu.memory_space<vmem>>, vector<8x128xf32>,
    return
  }
}

</mosaic_0001>

<llo_original>
// kernel: catvae_pallas_forward.1
$region0: #{catvae_pallas_forward.1}
  #allocation0 [shape = 'u32[]', space=smem, size = 0x4, offset = 0x4, fixed_abs, tag = 'smem constant byte address 0x4 - core index']
  #allocation1 [shape = 'u32[72,128]{1,0:T(1,128)}', space=vmem, size = 0x9000, scoped, tag = 'internal scratch']
  %s0 = inlined_call_operand.vmem [shape: bf16[72,128], index: 0, kind: input, shape index: {}]
  %s1 = inlined_call_operand.vmem [shape: f32[8,128], index: 1, kind: input, shape index: {}]
  %s2 = inlined_call_operand.vmem [shape: bf16[128,128], index: 2, kind: input, shape index: {}]
  %s3 = inlined_call_operand.vmem [shape: f32[1,128], index: 3, kind: input, shape index: {}]
  %s4 = inlined_call_operand.vmem [shape: bf16[256,128], index: 4, kind: input, shape index: {}]
  %s5 = inlined_call_operand.vmem [shape: f32[1,128], index: 5, kind: input, shape index: {}]
  %s6 = inlined_call_operand.vmem [shape: bf16[128,128], index: 6, kind: input, shape index: {}]
  %s7 = inlined_call_operand.vmem [shape: f32[1,128], index: 7, kind: input, shape index: {}]
  %s8 = inlined_call_operand.vmem [shape: bf16[128,128], index: 8, kind: input, shape index: {}]
  %s9 = inlined_call_operand.vmem [shape: f32[1,128], index: 9, kind: input, shape index: {}]
  %s10 = inlined_call_operand.vmem [shape: bf16[128,128], index: 10, kind: input, shape index: {}]
  %s11 = inlined_call_operand.vmem [shape: f32[1,128], index: 11, kind: input, shape index: {}]
  %s12 = inlined_call_operand.hbm [shape: f32[8,128], index: 12, kind: output, shape index: {0}]
  %s13 = inlined_call_operand.hbm [shape: f32[8,128], index: 13, kind: output, shape index: {1}]
  %14 = xla_tuple %s12, %s13
  %s15 = sld [smem:[#allocation0]]
  $region66: #{catvae_pallas_forward.1} parent=0
    _
  %s17 = ssub.s32 1, %s15
  %s18 = scalar_select 0, %s17, %s15
  $region1: #{catvae_pallas_forward.1} parent=0
    #allocation2 [shape = 'u8[4096]{0}', space=vmem, size = 0x1000, scoped, tag = 'output window, operand 0, single buffered']
    #allocation3 [shape = 's32[1]{0}', space=sflag, size = 0x4, scoped, tag = 'scoped memory for catvae_pallas_forward.1']
    #allocation4 [shape = 'u8[4096]{0}', space=vmem, size = 0x1000, scoped, tag = 'output window, operand 1, single buffered']
    #allocation5 [shape = 's32[1]{0}', space=sflag, size = 0x4, scoped, tag = 'scoped memory for catvae_pallas_forward.1']
    %19 = vsyncpa [#allocation3], 0
    %20 = vsyncpa [#allocation5], 0
    // Predicated region
    $region2: #{catvae_pallas_forward.1} parent=1 // pred_check
      _
    $region3: #{catvae_pallas_forward.1} parent=1 // pred_check_branch
      %22 = sbr.rel (0) target = $region5
    $region4: #{catvae_pallas_forward.1} parent=1 // pred_region
      _
    $region5: #{catvae_pallas_forward.1} parent=1 // pred_fallthru
      _
    // Predicated region
    $region6: #{catvae_pallas_forward.1} parent=1 // pred_check
      _
    $region7: #{catvae_pallas_forward.1} parent=1 // pred_check_branch
      %24 = sbr.rel (0) target = $region9
    $region8: #{catvae_pallas_forward.1} parent=1 // pred_region
      _
    $region9: #{catvae_pallas_forward.1} parent=1 // pred_fallthru
      _
    // Predicated region
    $region10: #{catvae_pallas_forward.1} parent=1 // pred_check
      _
    $region11: #{catvae_pallas_forward.1} parent=1 // pred_check_branch
      %26 = sbr.rel (0) target = $region13
    $region12: #{catvae_pallas_forward.1} parent=1 // pred_region
      _
    $region13: #{catvae_pallas_forward.1} parent=1 // pred_fallthru
      _
    // Predicated region
    $region14: #{catvae_pallas_forward.1} parent=1 // pred_check
      _
    $region15: #{catvae_pallas_forward.1} parent=1 // pred_check_branch
      %28 = sbr.rel (0) target = $region17
    $region16: #{catvae_pallas_forward.1} parent=1 // pred_region
      _
    $region17: #{catvae_pallas_forward.1} parent=1 // pred_fallthru
      _
    // Predicated region
    $region18: #{catvae_pallas_forward.1} parent=1 // pred_check
      _
    $region19: #{catvae_pallas_forward.1} parent=1 // pred_check_branch
      %30 = sbr.rel (0) target = $region21
    $region20: #{catvae_pallas_forward.1} parent=1 // pred_region
      _
    $region21: #{catvae_pallas_forward.1} parent=1 // pred_fallthru
      _
    // Predicated region
    $region22: #{catvae_pallas_forward.1} parent=1 // pred_check
      _
    $region23: #{catvae_pallas_forward.1} parent=1 // pred_check_branch
      %32 = sbr.rel (0) target = $region25
    $region24: #{catvae_pallas_forward.1} parent=1 // pred_region
      _
    $region25: #{catvae_pallas_forward.1} parent=1 // pred_fallthru
      _
    // Predicated region
    $region26: #{catvae_pallas_forward.1} parent=1 // pred_check
      _
    $region27: #{catvae_pallas_forward.1} parent=1 // pred_check_branch
      %34 = sbr.rel (0) target = $region29
    $region28: #{catvae_pallas_forward.1} parent=1 // pred_region
      _
    $region29: #{catvae_pallas_forward.1} parent=1 // pred_fallthru
      _
    // Predicated region
    $region30: #{catvae_pallas_forward.1} parent=1 // pred_check
      _
    $region31: #{catvae_pallas_forward.1} parent=1 // pred_check_branch
      %36 = sbr.rel (0) target = $region33
    $region32: #{catvae_pallas_forward.1} parent=1 // pred_region
      _
    $region33: #{catvae_pallas_forward.1} parent=1 // pred_fallthru
      _
    // Predicated region
    $region34: #{catvae_pallas_forward.1} parent=1 // pred_check
      _
    $region35: #{catvae_pallas_forward.1} parent=1 // pred_check_branch
      %38 = sbr.rel (0) target = $region37
    $region36: #{catvae_pallas_forward.1} parent=1 // pred_region
      _
    $region37: #{catvae_pallas_forward.1} parent=1 // pred_fallthru
      _
    // Predicated region
    $region38: #{catvae_pallas_forward.1} parent=1 // pred_check
      _
    $region39: #{catvae_pallas_forward.1} parent=1 // pred_check_branch
      %40 = sbr.rel (0) target = $region41
    $region40: #{catvae_pallas_forward.1} parent=1 // pred_region
      _
    $region41: #{catvae_pallas_forward.1} parent=1 // pred_fallthru
      _
    // Predicated region
    $region42: #{catvae_pallas_forward.1} parent=1 // pred_check
      _
    $region43: #{catvae_pallas_forward.1} parent=1 // pred_check_branch
      %42 = sbr.rel (0) target = $region45
    $region44: #{catvae_pallas_forward.1} parent=1 // pred_region
      _
    $region45: #{catvae_pallas_forward.1} parent=1 // pred_fallthru
      _
    // Predicated region
    $region46: #{catvae_pallas_forward.1} parent=1 // pred_check
      _
    $region47: #{catvae_pallas_forward.1} parent=1 // pred_check_branch
      %44 = sbr.rel (0) target = $region49
    $region48: #{catvae_pallas_forward.1} parent=1 // pred_region
      _
    $region49: #{catvae_pallas_forward.1} parent=1 // pred_fallthru
      _
    %v45 = vld [vmem:[%s0] sm:$0xf]
    %v46 = vld [vmem:[%s0 + $0x4] sm:$0xf]
    %v47 = vld [vmem:[%s0 + $0x8] sm:$0xf]
    %v48 = vld [vmem:[%s0 + $0xc] sm:$0xf]
    %v49 = vld [vmem:[%s0 + $0x10] sm:$0xf]
    %v50 = vld [vmem:[%s0 + $0x14] sm:$0xf]
    %v51 = vld [vmem:[%s0 + $0x18] sm:$0xf]
    %v52 = vld [vmem:[%s0 + $0x1c] sm:$0xf]
    %v53 = vld [vmem:[%s0 + $0x20] sm:$0xf]
    %v54 = vld [vmem:[%s2] sm:$0xf]
    %v55 = vld [vmem:[%s2 + $0x4] sm:$0xf]
    %v56 = vld [vmem:[%s2 + $0x8] sm:$0xf]
    %v57 = vld [vmem:[%s2 + $0xc] sm:$0xf]
    %v58 = vld [vmem:[%s2 + $0x10] sm:$0xf]
    %v59 = vld [vmem:[%s2 + $0x14] sm:$0xf]
    %v60 = vld [vmem:[%s2 + $0x18] sm:$0xf]
    %v61 = vld [vmem:[%s2 + $0x1c] sm:$0xf]
    %v62 = vld [vmem:[%s2 + $0x20] sm:$0xf]
    %v63 = vld [vmem:[%s2 + $0x24] sm:$0xf]
    %v64 = vld [vmem:[%s2 + $0x28] sm:$0xf]
    %v65 = vld [vmem:[%s2 + $0x2c] sm:$0xf]
    %v66 = vld [vmem:[%s2 + $0x30] sm:$0xf]
    %v67 = vld [vmem:[%s2 + $0x34] sm:$0xf]
    %v68 = vld [vmem:[%s2 + $0x38] sm:$0xf]
    %v69 = vld [vmem:[%s2 + $0x3c] sm:$0xf]
    %v70 = vld [vmem:[%s3] sm:$0x1]
    %v72 = vperm.slane %v70, 0
    %v83 = vunpack.c.l.b16 %v45
    %v84 = vunpack.c.l.b16 %v46
    %v85 = vunpack.c.l.b16 %v47
    %v86 = vunpack.c.l.b16 %v48
    %v87 = vunpack.c.l.b16 %v49
    %v88 = vunpack.c.l.b16 %v50
    %v89 = vunpack.c.l.b16 %v51
    %v90 = vunpack.c.l.b16 %v52
    %v91 = vunpack.c.l.b16 %v53
    %v92 = vpack.c.b16 %v84, %v83
    %v93 = vpack.c.b16 %v86, %v85
    %v94 = vpack.c.b16 %v88, %v87
    %v95 = vpack.c.b16 %v90, %v89
    %v96 = vpack.c.b16 %v91, %v91
    %v118 = vunpack.c.l.b16 %v54
    %v119 = vunpack.c.l.b16 %v55
    %v120 = vunpack.c.l.b16 %v56
    %v121 = vunpack.c.l.b16 %v57
    %v122 = vunpack.c.l.b16 %v58
    %v123 = vunpack.c.l.b16 %v59
    %v124 = vunpack.c.l.b16 %v60
    %v125 = vunpack.c.l.b16 %v61
    %v126 = vunpack.c.l.b16 %v62
    %v127 = vunpack.c.l.b16 %v63
    %v128 = vunpack.c.l.b16 %v64
    %v129 = vunpack.c.l.b16 %v65
    %v130 = vunpack.c.l.b16 %v66
    %v131 = vunpack.c.l.b16 %v67
    %v132 = vunpack.c.l.b16 %v68
    %v133 = vunpack.c.l.b16 %v69
    %v134 = vpack.c.b16 %v119, %v118
    %v135 = vpack.c.b16 %v121, %v120
    %v136 = vpack.c.b16 %v123, %v122
    %v137 = vpack.c.b16 %v125, %v124
    %v138 = vpack.c.b16 %v127, %v126
    %v139 = vpack.c.b16 %v129, %v128
    %v140 = vpack.c.b16 %v131, %v130
    %v141 = vpack.c.b16 %v133, %v132
    %150 = vmatpush.bf16.msra.mxu0 %v141
    %151 = vmatpush.bf16.msra.mxu0 %v140
    %152 = vmatpush.bf16.msra.mxu0 %v139
    %153 = vmatpush.bf16.msra.mxu0 %v138
    %154 = vmatpush.bf16.msra.mxu0 %v137
    %155 = vmatpush.bf16.msra.mxu0 %v136
    %156 = vmatpush.bf16.msra.mxu0 %v135
    %157 = vmatpush.bf16.msra.mxu0 %v134
    %158 = vmatmul.bf16.gmra.mxu0 %v92
    %v159 = vpop.f32.mrf.mxu0
    %v160 = vadd.f32 %v72, %v159
    %v161 = vpop.f32.mrf.mxu0
    %v162 = vadd.f32 %v72, %v161
    %163 = vmatmul.bf16.gmra.mxu0 %v93
    %v164 = vpop.f32.mrf.mxu0
    %v165 = vadd.f32 %v72, %v164
    %v166 = vpop.f32.mrf.mxu0
    %v167 = vadd.f32 %v72, %v166
    %168 = vmatmul.bf16.gmra.mxu0 %v94
    %v169 = vpop.f32.mrf.mxu0
    %v170 = vadd.f32 %v72, %v169
    %v171 = vpop.f32.mrf.mxu0
    %v172 = vadd.f32 %v72, %v171
    %173 = vmatmul.bf16.gmra.mxu0 %v95
    %v174 = vpop.f32.mrf.mxu0
    %v175 = vadd.f32 %v72, %v174
    %v176 = vpop.f32.mrf.mxu0
    %v177 = vadd.f32 %v72, %v176
    %178 = vmatmul.bf16.gmra.mxu0 %v96
    %v179 = vpop.f32.mrf.mxu0
    %v180 = vadd.f32 %v72, %v179
    %v181 = vpop.f32.mrf.mxu0
    %182 = vdwg.mxu0
    %v183 = vmax.f32 %v160, 0.0
    %v184 = vmax.f32 %v162, 0.0
    %v185 = vmax.f32 %v165, 0.0
    %v186 = vmax.f32 %v167, 0.0
    %v187 = vmax.f32 %v170, 0.0
    %v188 = vmax.f32 %v172, 0.0
    %v189 = vmax.f32 %v175, 0.0
    %v190 = vmax.f32 %v177, 0.0
    %v191 = vmax.f32 %v180, 0.0
    %192 = vrot.lane.b32.xlu0 %v184, 16
    %v193 = vpop.permute.xlu0 %192
    %v194 = vadd.f32 %v183, %v193
    %195 = vrot.lane.b32.xlu0 %v185, 32
    %v196 = vpop.permute.xlu0 %195
    %v197 = vadd.f32 %v194, %v196
    %198 = vrot.lane.b32.xlu0 %v186, 48
    %v199 = vpop.permute.xlu0 %198
    %v200 = vadd.f32 %v197, %v199
    %201 = vrot.lane.b32.xlu0 %v187, 64
    %v202 = vpop.permute.xlu0 %201
    %v203 = vadd.f32 %v200, %v202
    %204 = vrot.lane.b32.xlu0 %v188, 80
    %v205 = vpop.permute.xlu0 %204
    %v206 = vadd.f32 %v203, %v205
    %207 = vrot.lane.b32.xlu0 %v189, 96
    %v208 = vpop.permute.xlu0 %207
    %v209 = vadd.f32 %v206, %v208
    %210 = vrot.lane.b32.xlu0 %v190, 112
    %v211 = vpop.permute.xlu0 %210
    %v212 = vadd.f32 %v209, %v211
    %v213 = vpack.c.bf16 %v212, %v212
    %v214 = vpack.c.bf16 %v191, %v191
    %v215 = vld [vmem:[%s4] sm:$0xf]
    %v216 = vld [vmem:[%s4 + $0x4] sm:$0xf]
    %v217 = vld [vmem:[%s4 + $0x8] sm:$0xf]
    %v218 = vld [vmem:[%s4 + $0xc] sm:$0xf]
    %v219 = vld [vmem:[%s4 + $0x10] sm:$0xf]
    %v220 = vld [vmem:[%s4 + $0x14] sm:$0xf]
    %v221 = vld [vmem:[%s4 + $0x18] sm:$0xf]
    %v222 = vld [vmem:[%s4 + $0x1c] sm:$0xf]
    %v223 = vld [vmem:[%s4 + $0x20] sm:$0xf]
    %v224 = vld [vmem:[%s4 + $0x24] sm:$0xf]
    %v225 = vld [vmem:[%s4 + $0x28] sm:$0xf]
    %v226 = vld [vmem:[%s4 + $0x2c] sm:$0xf]
    %v227 = vld [vmem:[%s4 + $0x30] sm:$0xf]
    %v228 = vld [vmem:[%s4 + $0x34] sm:$0xf]
    %v229 = vld [vmem:[%s4 + $0x38] sm:$0xf]
    %v230 = vld [vmem:[%s4 + $0x3c] sm:$0xf]
    %v231 = vld [vmem:[%s4 + $0x40] sm:$0xf]
    %v232 = vld [vmem:[%s4 + $0x44] sm:$0xf]
    %v233 = vld [vmem:[%s4 + $0x48] sm:$0xf]
    %v234 = vld [vmem:[%s4 + $0x4c] sm:$0xf]
    %v235 = vld [vmem:[%s4 + $0x50] sm:$0xf]
    %v236 = vld [vmem:[%s4 + $0x54] sm:$0xf]
    %v237 = vld [vmem:[%s4 + $0x58] sm:$0xf]
    %v238 = vld [vmem:[%s4 + $0x5c] sm:$0xf]
    %v239 = vld [vmem:[%s4 + $0x60] sm:$0xf]
    %v240 = vld [vmem:[%s4 + $0x64] sm:$0xf]
    %v241 = vld [vmem:[%s4 + $0x68] sm:$0xf]
    %v242 = vld [vmem:[%s4 + $0x6c] sm:$0xf]
    %v243 = vld [vmem:[%s4 + $0x70] sm:$0xf]
    %v244 = vld [vmem:[%s4 + $0x74] sm:$0xf]
    %v245 = vld [vmem:[%s4 + $0x78] sm:$0xf]
    %v246 = vld [vmem:[%s4 + $0x7c] sm:$0xf]
    %v247 = vld [vmem:[%s5] sm:$0x1]
    %v249 = vperm.slane %v247, 0
    %v283 = vunpack.c.l.b16 %v215
    %v284 = vunpack.c.l.b16 %v216
    %v285 = vunpack.c.l.b16 %v217
    %v286 = vunpack.c.l.b16 %v218
    %v287 = vunpack.c.l.b16 %v219
    %v288 = vunpack.c.l.b16 %v220
    %v289 = vunpack.c.l.b16 %v221
    %v290 = vunpack.c.l.b16 %v222
    %v291 = vunpack.c.l.b16 %v223
    %v292 = vunpack.c.l.b16 %v224
    %v293 = vunpack.c.l.b16 %v225
    %v294 = vunpack.c.l.b16 %v226
    %v295 = vunpack.c.l.b16 %v227
    %v296 = vunpack.c.l.b16 %v228
    %v297 = vunpack.c.l.b16 %v229
    %v298 = vunpack.c.l.b16 %v230
    %v299 = vunpack.c.l.b16 %v231
    %v300 = vunpack.c.l.b16 %v232
    %v301 = vunpack.c.l.b16 %v233
    %v302 = vunpack.c.l.b16 %v234
    %v303 = vunpack.c.l.b16 %v235
    %v304 = vunpack.c.l.b16 %v236
    %v305 = vunpack.c.l.b16 %v237
    %v306 = vunpack.c.l.b16 %v238
    %v307 = vunpack.c.l.b16 %v239
    %v308 = vunpack.c.l.b16 %v240
    %v309 = vunpack.c.l.b16 %v241
    %v310 = vunpack.c.l.b16 %v242
    %v311 = vunpack.c.l.b16 %v243
    %v312 = vunpack.c.l.b16 %v244
    %v313 = vunpack.c.l.b16 %v245
    %v314 = vunpack.c.l.b16 %v246
    %v315 = vpack.c.b16 %v284, %v283
    %v316 = vpack.c.b16 %v286, %v285
    %v317 = vpack.c.b16 %v288, %v287
    %v318 = vpack.c.b16 %v290, %v289
    %v319 = vpack.c.b16 %v292, %v291
    %v320 = vpack.c.b16 %v294, %v293
    %v321 = vpack.c.b16 %v296, %v295
    %v322 = vpack.c.b16 %v298, %v297
    %v323 = vpack.c.b16 %v300, %v299
    %v324 = vpack.c.b16 %v302, %v301
    %v325 = vpack.c.b16 %v304, %v303
    %v326 = vpack.c.b16 %v306, %v305
    %v327 = vpack.c.b16 %v308, %v307
    %v328 = vpack.c.b16 %v310, %v309
    %v329 = vpack.c.b16 %v312, %v311
    %v330 = vpack.c.b16 %v314, %v313
    %347 = vmatpush.bf16.msra.mxu0 %v322
    %348 = vmatpush.bf16.msra.mxu0 %v321
    %349 = vmatpush.bf16.msra.mxu0 %v320
    %350 = vmatpush.bf16.msra.mxu0 %v319
    %351 = vmatpush.bf16.msra.mxu0 %v318
    %352 = vmatpush.bf16.msra.mxu0 %v317
    %353 = vmatpush.bf16.msra.mxu0 %v316
    %354 = vmatpush.bf16.msra.mxu0 %v315
    %355 = vmatmul.bf16.gmra.mxu0 %v213
    %v356 = vpop.f32.mrf.mxu0
    %v357 = vadd.f32 %v249, %v356
    %v358 = vpop.f32.mrf.mxu0
    %359 = vdwg.mxu0
    %360 = vmatpush.bf16.msra.mxu0 %v330
    %361 = vmatpush.bf16.msra.mxu0 %v329
    %362 = vmatpush.bf16.msra.mxu0 %v328
    %363 = vmatpush.bf16.msra.mxu0 %v327
    %364 = vmatpush.bf16.msra.mxu0 %v326
    %365 = vmatpush.bf16.msra.mxu0 %v325
    %366 = vmatpush.bf16.msra.mxu0 %v324
    %367 = vmatpush.bf16.msra.mxu0 %v323
    %368 = vmatmul.bf16.gmra.mxu0 %v214
    %v369 = vpop.f32.mrf.mxu0
    %v370 = vadd.f32 %v357, %v369
    %v371 = vpop.f32.mrf.mxu0
    %372 = vdwg.mxu0
    %v373 = vmax.f32 %v370, 0.0
    %v374 = vpack.c.bf16 %v373, %v373
    %v375 = vld [vmem:[%s6] sm:$0xf]
    %v376 = vld [vmem:[%s6 + $0x4] sm:$0xf]
    %v377 = vld [vmem:[%s6 + $0x8] sm:$0xf]
    %v378 = vld [vmem:[%s6 + $0xc] sm:$0xf]
    %v379 = vld [vmem:[%s6 + $0x10] sm:$0xf]
    %v380 = vld [vmem:[%s6 + $0x14] sm:$0xf]
    %v381 = vld [vmem:[%s6 + $0x18] sm:$0xf]
    %v382 = vld [vmem:[%s6 + $0x1c] sm:$0xf]
    %v383 = vld [vmem:[%s6 + $0x20] sm:$0xf]
    %v384 = vld [vmem:[%s6 + $0x24] sm:$0xf]
    %v385 = vld [vmem:[%s6 + $0x28] sm:$0xf]
    %v386 = vld [vmem:[%s6 + $0x2c] sm:$0xf]
    %v387 = vld [vmem:[%s6 + $0x30] sm:$0xf]
    %v388 = vld [vmem:[%s6 + $0x34] sm:$0xf]
    %v389 = vld [vmem:[%s6 + $0x38] sm:$0xf]
    %v390 = vld [vmem:[%s6 + $0x3c] sm:$0xf]
    %v391 = vld [vmem:[%s7] sm:$0x1]
    %v393 = vperm.slane %v391, 0
    %v411 = vunpack.c.l.b16 %v375
    %v412 = vunpack.c.l.b16 %v376
    %v413 = vunpack.c.l.b16 %v377
    %v414 = vunpack.c.l.b16 %v378
    %v415 = vunpack.c.l.b16 %v379
    %v416 = vunpack.c.l.b16 %v380
    %v417 = vunpack.c.l.b16 %v381
    %v418 = vunpack.c.l.b16 %v382
    %v419 = vunpack.c.l.b16 %v383
    %v420 = vunpack.c.l.b16 %v384
    %v421 = vunpack.c.l.b16 %v385
    %v422 = vunpack.c.l.b16 %v386
    %v423 = vunpack.c.l.b16 %v387
    %v424 = vunpack.c.l.b16 %v388
    %v425 = vunpack.c.l.b16 %v389
    %v426 = vunpack.c.l.b16 %v390
    %v427 = vpack.c.b16 %v412, %v411
    %v428 = vpack.c.b16 %v414, %v413
    %v429 = vpack.c.b16 %v416, %v415
    %v430 = vpack.c.b16 %v418, %v417
    %v431 = vpack.c.b16 %v420, %v419
    %v432 = vpack.c.b16 %v422, %v421
    %v433 = vpack.c.b16 %v424, %v423
    %v434 = vpack.c.b16 %v426, %v425
    %443 = vmatpush.bf16.msra.mxu0 %v434
    %444 = vmatpush.bf16.msra.mxu0 %v433
    %445 = vmatpush.bf16.msra.mxu0 %v432
    %446 = vmatpush.bf16.msra.mxu0 %v431
    %447 = vmatpush.bf16.msra.mxu0 %v430
    %448 = vmatpush.bf16.msra.mxu0 %v429
    %449 = vmatpush.bf16.msra.mxu0 %v428
    %450 = vmatpush.bf16.msra.mxu0 %v427
    %451 = vmatmul.bf16.gmra.mxu0 %v374
    %v452 = vpop.f32.mrf.mxu0
    %v453 = vadd.f32 %v393, %v452
    %v454 = vpop.f32.mrf.mxu0
    %455 = vdwg.mxu0
    %v456 = vmax.f32 %v453, 0.0
    %v457 = vpack.c.bf16 %v456, %v456
    %v458 = vld [vmem:[%s8] sm:$0xf]
    %v459 = vld [vmem:[%s8 + $0x4] sm:$0xf]
    %v460 = vld [vmem:[%s8 + $0x8] sm:$0xf]
    %v461 = vld [vmem:[%s8 + $0xc] sm:$0xf]
    %v462 = vld [vmem:[%s8 + $0x10] sm:$0xf]
    %v463 = vld [vmem:[%s8 + $0x14] sm:$0xf]
    %v464 = vld [vmem:[%s8 + $0x18] sm:$0xf]
    %v465 = vld [vmem:[%s8 + $0x1c] sm:$0xf]
    %v466 = vld [vmem:[%s8 + $0x20] sm:$0xf]
    %v467 = vld [vmem:[%s8 + $0x24] sm:$0xf]
    %v468 = vld [vmem:[%s8 + $0x28] sm:$0xf]
    %v469 = vld [vmem:[%s8 + $0x2c] sm:$0xf]
    %v470 = vld [vmem:[%s8 + $0x30] sm:$0xf]
    %v471 = vld [vmem:[%s8 + $0x34] sm:$0xf]
    %v472 = vld [vmem:[%s8 + $0x38] sm:$0xf]
    %v473 = vld [vmem:[%s8 + $0x3c] sm:$0xf]
    %v474 = vld [vmem:[%s9] sm:$0x1]
    %v476 = vperm.slane %v474, 0
    %v494 = vunpack.c.l.b16 %v458
    %v495 = vunpack.c.l.b16 %v459
    %v496 = vunpack.c.l.b16 %v460
    %v497 = vunpack.c.l.b16 %v461
    %v498 = vunpack.c.l.b16 %v462
    %v499 = vunpack.c.l.b16 %v463
    %v500 = vunpack.c.l.b16 %v464
    %v501 = vunpack.c.l.b16 %v465
    %v502 = vunpack.c.l.b16 %v466
    %v503 = vunpack.c.l.b16 %v467
    %v504 = vunpack.c.l.b16 %v468
    %v505 = vunpack.c.l.b16 %v469
    %v506 = vunpack.c.l.b16 %v470
    %v507 = vunpack.c.l.b16 %v471
    %v508 = vunpack.c.l.b16 %v472
    %v509 = vunpack.c.l.b16 %v473
    %v510 = vpack.c.b16 %v495, %v494
    %v511 = vpack.c.b16 %v497, %v496
    %v512 = vpack.c.b16 %v499, %v498
    %v513 = vpack.c.b16 %v501, %v500
    %v514 = vpack.c.b16 %v503, %v502
    %v515 = vpack.c.b16 %v505, %v504
    %v516 = vpack.c.b16 %v507, %v506
    %v517 = vpack.c.b16 %v509, %v508
    %526 = vmatpush.bf16.msra.mxu0 %v517
    %527 = vmatpush.bf16.msra.mxu0 %v516
    %528 = vmatpush.bf16.msra.mxu0 %v515
    %529 = vmatpush.bf16.msra.mxu0 %v514
    %530 = vmatpush.bf16.msra.mxu0 %v513
    %531 = vmatpush.bf16.msra.mxu0 %v512
    %532 = vmatpush.bf16.msra.mxu0 %v511
    %533 = vmatpush.bf16.msra.mxu0 %v510
    %534 = vmatmul.bf16.gmra.mxu0 %v457
    %v535 = vpop.f32.mrf.mxu0
    %v536 = vadd.f32 %v476, %v535
    %v537 = vpop.f32.mrf.mxu0
    %538 = vdwg.mxu0
    %v539 = vmax.f32 %v536, 0.0
    %v540 = vpack.c.bf16 %v539, %v539
    %v541 = vld [vmem:[%s10] sm:$0xf]
    %v542 = vld [vmem:[%s10 + $0x4] sm:$0xf]
    %v543 = vld [vmem:[%s10 + $0x8] sm:$0xf]
    %v544 = vld [vmem:[%s10 + $0xc] sm:$0xf]
    %v545 = vld [vmem:[%s10 + $0x10] sm:$0xf]
    %v546 = vld [vmem:[%s10 + $0x14] sm:$0xf]
    %v547 = vld [vmem:[%s10 + $0x18] sm:$0xf]
    %v548 = vld [vmem:[%s10 + $0x1c] sm:$0xf]
    %v549 = vld [vmem:[%s10 + $0x20] sm:$0xf]
    %v550 = vld [vmem:[%s10 + $0x24] sm:$0xf]
    %v551 = vld [vmem:[%s10 + $0x28] sm:$0xf]
    %v552 = vld [vmem:[%s10 + $0x2c] sm:$0xf]
    %v553 = vld [vmem:[%s10 + $0x30] sm:$0xf]
    %v554 = vld [vmem:[%s10 + $0x34] sm:$0xf]
    %v555 = vld [vmem:[%s10 + $0x38] sm:$0xf]
    %v556 = vld [vmem:[%s10 + $0x3c] sm:$0xf]
    %v557 = vld [vmem:[%s11] sm:$0x1]
    %v559 = vperm.slane %v557, 0
    %v577 = vunpack.c.l.b16 %v541
    %v578 = vunpack.c.l.b16 %v542
    %v579 = vunpack.c.l.b16 %v543
    %v580 = vunpack.c.l.b16 %v544
    %v581 = vunpack.c.l.b16 %v545
    %v582 = vunpack.c.l.b16 %v546
    %v583 = vunpack.c.l.b16 %v547
    %v584 = vunpack.c.l.b16 %v548
    %v585 = vunpack.c.l.b16 %v549
    %v586 = vunpack.c.l.b16 %v550
    %v587 = vunpack.c.l.b16 %v551
    %v588 = vunpack.c.l.b16 %v552
    %v589 = vunpack.c.l.b16 %v553
    %v590 = vunpack.c.l.b16 %v554
    %v591 = vunpack.c.l.b16 %v555
    %v592 = vunpack.c.l.b16 %v556
    %v593 = vpack.c.b16 %v578, %v577
    %v594 = vpack.c.b16 %v580, %v579
    %v595 = vpack.c.b16 %v582, %v581
    %v596 = vpack.c.b16 %v584, %v583
    %v597 = vpack.c.b16 %v586, %v585
    %v598 = vpack.c.b16 %v588, %v587
    %v599 = vpack.c.b16 %v590, %v589
    %v600 = vpack.c.b16 %v592, %v591
    %609 = vmatpush.bf16.msra.mxu0 %v600
    %610 = vmatpush.bf16.msra.mxu0 %v599
    %611 = vmatpush.bf16.msra.mxu0 %v598
    %612 = vmatpush.bf16.msra.mxu0 %v597
    %613 = vmatpush.bf16.msra.mxu0 %v596
    %614 = vmatpush.bf16.msra.mxu0 %v595
    %615 = vmatpush.bf16.msra.mxu0 %v594
    %616 = vmatpush.bf16.msra.mxu0 %v593
    %617 = vmatmul.bf16.gmra.mxu0 %v540
    %v618 = vpop.f32.mrf.mxu0
    %v619 = vadd.f32 %v559, %v618
    %v620 = vpop.f32.mrf.mxu0
    %621 = vdwg.mxu0
    %622 = vst [vmem:[#allocation4] sm:$0xff] %v619
    %v623 = vld [vmem:[%s1] sm:$0xff]
    %v624 = vadd.f32 %v623, 1e-20
    %v625 = vlog2.pop %v624
    %v626 = vmul.f32 %v625, 0.6931472
    %v627 = vsub.f32 0.0, %v626
    %v628 = vadd.f32 %v627, 1e-20
    %v629 = vlog2.pop %v628
    %v630 = vmul.f32 %v629, 0.6931472
    %v631 = vsub.f32 0.0, %v630
    %v632 = vadd.f32 %v619, %v631
    %v633 = vmul.f32 %v632, 0.1
    %v634 = vlaneseq
    %v635 = vand.u32 %v634, 127
    %vm636 = vcmp.lt.s32.totalorder %v635, 8
    %v637 = vsel %vm636, %v633, -inf
    %638 = vmax.xlane.f32.xlu0 %v637
    %v639 = vpop.xlane.xlu0 %638
    %v640 = vsub.f32 %v633, %v639
    %v641 = vmul.f32 %v640, 1.442695
    %v642 = vpow.pop %v641
    %v643 = vsel %vm636, %v642, 0.0
    %644 = vadd.xlane.f32.xlu0 %v643
    %v645 = vpop.xlane.xlu0 %644
    %v646 = vrcp.pop %v645
    %v647 = vmul.f32 %v645, %v646
    %v648 = vsub.f32 1.0, %v647
    %v649 = vmul.f32 %v646, %v648
    %v650 = vadd.f32 %v646, %v649
    %vm651 = vweird.f32 %v645
    %vm652 = vweird.f32 %v646
    %vm653 = vmor %vm651, %vm652
    %v654 = vsel %vm653, %v646, %v650
    %v655 = vand.u32 2147483647, %v645
    %vm656 = vcmp.eq.f32.partialorder %v655, 8.507059e+37
    %v657 = vand.u32 %v645, 2147483648
    %v658 = vor.u32 1.1754944e-38, %v657
    %v659 = vsel %vm656, %v658, %v654
    %v660 = vmul.f32 %v643, %v659
    %661 = vst [vmem:[#allocation2] sm:$0xff] %v660
    // Predicated region
    $region50: #{catvae_pallas_forward.1} parent=1 // pred_check
      _
    $region51: #{catvae_pallas_forward.1} parent=1 // pred_check_branch
      %663 = sbr.rel (0) target = $region53
    $region52: #{catvae_pallas_forward.1} parent=1 // pred_region
      %665 = vsyncadd [#allocation3], 0
      %s667 = sshll.u32 [#allocation2], 4
      %s668 = int_to_ptr.vmem [resolvable:$true] %s667
      %s669 = sshll.u32 %s12, 4
      %s670 = int_to_ptr.hbm [resolvable:$true] %s669
      %672 = dma.vmem_to_hbm [thread:$0]  %s668, 128, %s670, [#allocation3]
    $region53: #{catvae_pallas_forward.1} parent=1 // pred_fallthru
      _
    // Predicated region
    $region54: #{catvae_pallas_forward.1} parent=1 // pred_check
      _
    $region55: #{catvae_pallas_forward.1} parent=1 // pred_check_branch
      %674 = sbr.rel (0) target = $region57
    $region56: #{catvae_pallas_forward.1} parent=1 // pred_region
      %676 = vsyncadd [#allocation5], 0
      %s678 = sshll.u32 [#allocation4], 4
      %s679 = int_to_ptr.vmem [resolvable:$true] %s678
      %s680 = sshll.u32 %s13, 4
      %s681 = int_to_ptr.hbm [resolvable:$true] %s680
      %683 = dma.vmem_to_hbm [thread:$0]  %s679, 128, %s681, [#allocation5]
    $region57: #{catvae_pallas_forward.1} parent=1 // pred_fallthru
      _
    // Predicated region
    $region58: #{catvae_pallas_forward.1} parent=1 // pred_check
      _
    $region59: #{catvae_pallas_forward.1} parent=1 // pred_check_branch
      %685 = sbr.rel (0) target = $region61
    $region60: #{catvae_pallas_forward.1} parent=1 // pred_region
      %687 = dma.done [#allocation3], 128
    $region61: #{catvae_pallas_forward.1} parent=1 // pred_fallthru
      _
    // Predicated region
    $region62: #{catvae_pallas_forward.1} parent=1 // pred_check
      _
    $region63: #{catvae_pallas_forward.1} parent=1 // pred_check_branch
      %689 = sbr.rel (0) target = $region65
    $region64: #{catvae_pallas_forward.1} parent=1 // pred_region
      %691 = dma.done [#allocation5], 128
    $region65: #{catvae_pallas_forward.1} parent=1 // pred_fallthru
      _
    %692 = vsyncpa [#allocation3], 1
    %693 = vsyncpa [#allocation5], 1

</llo_original>
